<compile_context>
chip_gen: v7x
topology: tpu7x:2x2x1
jax: 0.10.0
libtpu: 0.0.40
codegen_flags: <defaults>
</compile_context>

<pallas_src>
import functools

import jax
import jax.numpy as jnp
from jax.experimental import pallas as pl
from jax.experimental.pallas import tpu as pltpu

LANES = 128
SUBLANES = 8           # f32 accumulator sublane count
MAX_PARALLEL_CORES = 2  # v7x has 2 TCs; harmless (sequential) on v5e/v6e


def _sublane_multiple(dtype):
    """Sublane packing multiple for a dtype (8 for 32-bit, 16 for bf16, 32 for 8-bit)."""
    itemsize = jnp.dtype(dtype).itemsize
    return SUBLANES * max(1, 4 // itemsize)


def _loss_kernel(dist_ref, label_ref, out_ref, acc_ref, *,
                 margin, n_valid, block_rows, tiles_per_core,
                 total_tiles, last_tile_valid, needs_mask, has_phantom):
    c = pl.program_id(0)          # parallel (core) axis
    t = pl.program_id(1)          # reduction (tile) axis
    g = c * tiles_per_core + t    # global tile index

    @pl.when(t == 0)
    def _():
        acc_ref[...] = jnp.zeros_like(acc_ref)

    def compute_contrib():
        d = dist_ref[...].astype(jnp.float32)
        lbl = label_ref[...].astype(jnp.float32)
        d2 = d * d
        cl = jnp.maximum(jnp.float32(margin) - d, 0.0)
        c2 = cl * cl
        # label*d2 + (1-label)*c2 == c2 + label*(d2 - c2); the 0.5 factor is
        # folded into the final normalization (one multiply per call, not per elem).
        return c2 + lbl * (d2 - c2)

    def accumulate(contrib):
        # Reduce (block_rows, 128) -> (8, 128) with pure VPU vreg adds.
        if block_rows % SUBLANES == 0:
            acc_ref[...] += contrib.reshape(
                block_rows // SUBLANES, SUBLANES, LANES).sum(axis=0)
        else:
            # Tiny full-array block fallback (block_rows < 8).
            acc_ref[0:1, :] += contrib.sum(axis=0, keepdims=True)

    if needs_mask:
        # Steady-state tiles: no per-element masking on the hot path.
        if has_phantom:
            steady = jnp.logical_and(g < total_tiles, g != total_tiles - 1)
        else:
            steady = g != total_tiles - 1

        @pl.when(steady)
        def _():
            accumulate(compute_contrib())

        @pl.when(g == total_tiles - 1)
        def _():
            contrib = compute_contrib()
            # Tile-local flat index (< block_rows*128, safely within int32)
            # covers both the partial trailing rows and any sub-128 lane pad.
            row_idx = jax.lax.broadcasted_iota(jnp.int32, (block_rows, LANES), 0)
            col_idx = jax.lax.broadcasted_iota(jnp.int32, (block_rows, LANES), 1)
            local_idx = row_idx * LANES + col_idx
            accumulate(jnp.where(local_idx < last_tile_valid, contrib, 0.0))
    else:
        if has_phantom:
            @pl.when(g < total_tiles)
            def _():
                accumulate(compute_contrib())
        else:
            accumulate(compute_contrib())

    @pl.when(t == tiles_per_core - 1)
    def _():
        # Single cross-lane reduce + normalize per core, once per call.
        out_ref[0, 0] = jnp.sum(acc_ref[...]) * jnp.float32(0.5 / n_valid)


def fulcro_contrastive_loss(dist, label, margin=2.0, block_rows=4096):
    """Returns scalar mean contrastive loss (float32).

    `dist`/`label` may be any float/int/bool dtype; they are upcast to f32
    inside the kernel, so passing label as bf16/int8/bool halves/quarters its
    HBM traffic (do NOT pre-upcast to f32 upstream).
    """
    assert dist.shape == label.shape
    n_valid = dist.size
    if n_valid == 0:
        return jnp.float32(float("nan"))  # torch.mean on empty -> nan

    d_flat = jnp.ravel(dist)
    l_flat = jnp.ravel(label)

    # Pad only up to the next multiple of 128 lanes (at most 127 elements);
    # the padded tail falls in the last tile and is masked inside the kernel.
    n_pad = pl.cdiv(n_valid, LANES) * LANES
    if n_pad != n_valid:
        d_flat = jnp.pad(d_flat, (0, n_pad - n_valid))
        l_flat = jnp.pad(l_flat, (0, n_pad - n_valid))

    rows = n_pad // LANES
    d2 = d_flat.reshape(rows, LANES)
    l2 = l_flat.reshape(rows, LANES)

    # Sublane packing of the narrower input dtypes dictates tile rounding.
    packing = max(_sublane_multiple(d2.dtype), _sublane_multiple(l2.dtype))

    bytes_per_row = LANES * (d2.dtype.itemsize + l2.dtype.itemsize)
    # Keep 2 inputs x 2 pipeline buffers under ~28 MiB so the requested scoped
    # VMEM limit below is safe on every chip (v5e/v6e/v7x).
    max_blk = max(packing, ((28 << 20) // (2 * bytes_per_row)) // packing * packing)

    blk = min(int(block_rows), rows, max_blk)
    if blk != rows:
        blk = max(packing, (blk // packing) * packing)

    total_tiles = pl.cdiv(rows, blk)
    num_cores = min(MAX_PARALLEL_CORES, total_tiles)
    tiles_per_core = pl.cdiv(total_tiles, num_cores)
    has_phantom = num_cores * tiles_per_core != total_tiles
    last_tile_valid = n_valid - (total_tiles - 1) * blk * LANES
    needs_mask = last_tile_valid != blk * LANES

    if has_phantom:
        last = total_tiles - 1

        def in_index(c, t):
            # Phantom tiles re-read the last real tile (in-bounds) and are
            # excluded from accumulation inside the kernel.
            return (jnp.minimum(c * tiles_per_core + t, last), 0)
    else:
        def in_index(c, t):
            return (c * tiles_per_core + t, 0)

    kernel = functools.partial(
        _loss_kernel,
        margin=float(margin),
        n_valid=int(n_valid),
        block_rows=int(blk),
        tiles_per_core=int(tiles_per_core),
        total_tiles=int(total_tiles),
        last_tile_valid=int(last_tile_valid),
        needs_mask=bool(needs_mask),
        has_phantom=bool(has_phantom),
    )

    # Double-buffered input footprint + headroom, capped at 32 MiB (<= physical
    # VMEM everywhere, and the default scoped limit on v6e/v7x).
    step_bytes = blk * bytes_per_row
    vmem_limit = int(min(32 << 20, max(16 << 20, 2 * step_bytes + (4 << 20))))

    partials = pl.pallas_call(
        kernel,
        out_shape=jax.ShapeDtypeStruct((num_cores, 1), jnp.float32),
        grid_spec=pltpu.PrefetchScalarGridSpec(
            num_scalar_prefetch=0,
            grid=(num_cores, tiles_per_core),
            in_specs=[
                pl.BlockSpec((blk, LANES), in_index),
                pl.BlockSpec((blk, LANES), in_index),
            ],
            out_specs=pl.BlockSpec((1, 1), lambda c, t: (c, 0),
                                   memory_space=pltpu.SMEM),
            scratch_shapes=[pltpu.VMEM((SUBLANES, LANES), jnp.float32)],
        ),
        compiler_params=pltpu.CompilerParams(
            dimension_semantics=("parallel", "arbitrary"),
            vmem_limit_bytes=vmem_limit),
    )(d2, l2)

    # Sum the per-core partial means (trivial XLA op; 1 or 2 values).
    return jnp.sum(partials)


def _reference(dist, label, margin=2.0):
    dist = dist.astype(jnp.float32)
    label = label.astype(jnp.float32)
    return jnp.mean(0.5 * label * dist ** 2
                    + 0.5 * (1.0 - label) * jnp.maximum(margin - dist, 0.0) ** 2)


if __name__ == "__main__":
    key = jax.random.PRNGKey(0)
    k1, k2, k3, k4 = jax.random.split(key, 4)

    # Main case: the module's natural small shape.
    dist = jax.random.uniform(k1, (2, 4, 16, 16), jnp.float32) * 3.0
    label = jax.random.bernoulli(k2, 0.5, (2, 4, 16, 16)).astype(jnp.float32)
    loss = jax.block_until_ready(fulcro_contrastive_loss(dist, label, margin=2.0))
    ref = _reference(dist, label, margin=2.0)
    assert jnp.allclose(loss, ref, rtol=1e-5, atol=1e-6), (loss, ref)

    # Odd size (exercises lane padding + last-tile masking).
    dist_b = jax.random.uniform(k3, (3, 5, 7, 11), jnp.float32) * 3.0
    label_b = jax.random.bernoulli(k4, 0.5, (3, 5, 7, 11)).astype(jnp.float32)
    loss_b = jax.block_until_ready(fulcro_contrastive_loss(dist_b, label_b, margin=2.0))
    ref_b = _reference(dist_b, label_b, margin=2.0)
    assert jnp.allclose(loss_b, ref_b, rtol=1e-5, atol=1e-6), (loss_b, ref_b)

    # Multi-tile + two-core split + phantom tile + partial last tile.
    dist_c = jax.random.uniform(k1, (2, 4, 16, 33), jnp.float32) * 3.0
    label_c = jax.random.bernoulli(k2, 0.5, (2, 4, 16, 33)).astype(jnp.float32)
    loss_c = jax.block_until_ready(
        fulcro_contrastive_loss(dist_c, label_c, margin=2.0, block_rows=8))
    ref_c = _reference(dist_c, label_c, margin=2.0)
    assert jnp.allclose(loss_c, ref_c, rtol=1e-5, atol=1e-6), (loss_c, ref_c)

    print("KERNEL_OK")
</pallas_src>

<mosaic_0001>
module attributes {stable_mosaic.version = 11 : i64} {
  func.func @_loss_kernel(%arg0: i32, %arg1: i32, %arg2: memref<16x128xf32, #tpu.memory_space<vmem>>, %arg3: memref<16x128xf32, #tpu.memory_space<vmem>>, %arg4: memref<1x1xf32, #tpu.memory_space<smem>>, %arg5: memref<8x128xf32, #tpu.memory_space<vmem>>) attributes {dimension_semantics = [#tpu.dimension_semantics<parallel>, #tpu.dimension_semantics<arbitrary>], iteration_bounds = array<i64: 1, 1>, scalar_prefetch = 0 : i64, scratch_operands = 1 : i64, tpu.core_type = #tpu.core_type<tc>, window_params = [{transform_indices = @transform_0, window_bounds = array<i64: 16, 128>}, {transform_indices = @transform_1, window_bounds = array<i64: 16, 128>}, {transform_indices = @transform_2, window_bounds = array<i64: 1, 1>}]} {
    %c0_i32 = arith.constant 0 : i32
    %0 = arith.cmpi eq, %arg1, %c0_i32 : i32
    %1 = arith.extui %0 : i1 to i32
    %c0_i32_0 = arith.constant 0 : i32
    %2 = arith.cmpi ne, %1, %c0_i32_0 : i32
    scf.if %2 {
      %cst_12 = arith.constant 0.000000e+00 : f32
      %22 = vector.broadcast %cst_12 : f32 to vector<8x128xf32>
      %c0_13 = arith.constant 0 : index
      %c0_14 = arith.constant 0 : index
      %23 = vector.load %arg5[%c0_13, %c0_14] : memref<8x128xf32, #tpu.memory_space<vmem>>, vector<8x128xf32>
      tpu.vector_store %arg5[%c0_13, %c0_14], %22 {strides = array<i32>} : memref<8x128xf32, #tpu.memory_space<vmem>>, vector<8x128xf32>,
    } else {
    }
    %c0 = arith.constant 0 : index
    %c0_1 = arith.constant 0 : index
    %3 = vector.load %arg2[%c0, %c0_1] : memref<16x128xf32, #tpu.memory_space<vmem>>, vector<16x128xf32>
    %c0_2 = arith.constant 0 : index
    %c0_3 = arith.constant 0 : index
    %4 = vector.load %arg3[%c0_2, %c0_3] : memref<16x128xf32, #tpu.memory_space<vmem>>, vector<16x128xf32>
    %5 = arith.mulf %3, %3 : vector<16x128xf32>
    %cst = arith.constant 2.000000e+00 : f32
    %6 = vector.broadcast %cst : f32 to vector<16x128xf32>
    %7 = arith.subf %6, %3 : vector<16x128xf32>
    %cst_4 = arith.constant 0.000000e+00 : f32
    %8 = vector.broadcast %cst_4 : f32 to vector<16x128xf32>
    %9 = arith.maximumf %7, %8 : vector<16x128xf32>
    %10 = arith.mulf %9, %9 : vector<16x128xf32>
    %11 = arith.subf %5, %10 : vector<16x128xf32>
    %12 = arith.mulf %4, %11 : vector<16x128xf32>
    %13 = arith.addf %10, %12 : vector<16x128xf32>
    %c0_5 = arith.constant 0 : index
    %c0_6 = arith.constant 0 : index
    %14 = vector.load %arg5[%c0_5, %c0_6] : memref<8x128xf32, #tpu.memory_space<vmem>>, vector<8x128xf32>
    %15 = vector.shape_cast %13 : vector<16x128xf32> to vector<2x8x128xf32>
    %cst_7 = arith.constant dense<0.000000e+00> : vector<8x128xf32>
    %16 = vector.multi_reduction <add>, %15, %cst_7 [0] : vector<2x8x128xf32> to vector<8x128xf32>
    %17 = arith.addf %14, %16 : vector<8x128xf32>
    %c0_8 = arith.constant 0 : index
    %c0_9 = arith.constant 0 : index
    %18 = vector.load %arg5[%c0_8, %c0_9] : memref<8x128xf32, #tpu.memory_space<vmem>>, vector<8x128xf32>
    tpu.vector_store %arg5[%c0_8, %c0_9], %17 {strides = array<i32>} : memref<8x128xf32, #tpu.memory_space<vmem>>, vector<8x128xf32>,
    %c0_i32_10 = arith.constant 0 : i32
    %19 = arith.cmpi eq, %arg1, %c0_i32_10 : i32
    %20 = arith.extui %19 : i1 to i32
    %c0_i32_11 = arith.constant 0 : i32
    %21 = arith.cmpi ne, %20, %c0_i32_11 : i32
    scf.if %21 {
      %c0_12 = arith.constant 0 : index
      %c0_13 = arith.constant 0 : index
      %22 = vector.load %arg5[%c0_12, %c0_13] : memref<8x128xf32, #tpu.memory_space<vmem>>, vector<8x128xf32>
      %23 = vector.shape_cast %22 : vector<8x128xf32> to vector<1x8x128xf32>
      %cst_14 = arith.constant dense<0.000000e+00> : vector<1xf32>
      %24 = vector.multi_reduction <add>, %23, %cst_14 [1, 2] : vector<1x8x128xf32> to vector<1xf32>
      %25 = vector.shape_cast %24 : vector<1xf32> to vector<1x1x1xf32>
      %26 = vector.extract %25[0, 0, 0] : f32 from vector<1x1x1xf32>
      %cst_15 = arith.constant 2.44140625E-4 : f32
      %27 = arith.mulf %26, %cst_15 : f32
      %c0_16 = arith.constant 0 : index
      %c0_17 = arith.constant 0 : index
      %28 = memref.load %arg4[%c0_16, %c0_17] : memref<1x1xf32, #tpu.memory_space<smem>>
      memref.store %27, %arg4[%c0_16, %c0_17] : memref<1x1xf32, #tpu.memory_space<smem>>
    } else {
    }
    return
  }
  func.func @transform_0(%arg0: i32, %arg1: i32) -> (i32, i32) {
    %c1_i32 = arith.constant 1 : i32
    %0 = arith.muli %arg0, %c1_i32 : i32
    %1 = arith.addi %0, %arg1 : i32
    %c0_i32 = arith.constant 0 : i32
    %c0_i32_0 = arith.constant 0 : i32
    return %1, %c0_i32 : i32, i32
  }
  func.func @transform_1(%arg0: i32, %arg1: i32) -> (i32, i32) {
    %c1_i32 = arith.constant 1 : i32
    %0 = arith.muli %arg0, %c1_i32 : i32
    %1 = arith.addi %0, %arg1 : i32
    %c0_i32 = arith.constant 0 : i32
    %c0_i32_0 = arith.constant 0 : i32
    return %1, %c0_i32 : i32, i32
  }
  func.func @transform_2(%arg0: i32, %arg1: i32) -> (i32, i32) {
    %c0_i32 = arith.constant 0 : i32
    %c0_i32_0 = arith.constant 0 : i32
    return %arg0, %c0_i32 : i32, i32
  }
}

</mosaic_0001>

<llo_original>
// kernel: tpu_custom_call.1
$region0: #{tpu_custom_call.1}
  #allocation0 [shape = 'u32[]', space=smem, size = 0x4, offset = 0x4, fixed_abs, tag = 'smem constant byte address 0x4 - core index']
  #allocation1 [shape = 'u32[144,128]{1,0:T(1,128)}', space=vmem, size = 0x12000, scoped, tag = 'internal scratch']
  #allocation2 [shape = 'f32[8,128]{1,0:T(8,128)}', space=vmem, size = 0x1000, scoped, tag = 'scratch operand']
  %s0 = inlined_call_operand.hbm [shape: f32[16,128], index: 0, kind: input, shape index: {}]
  %s1 = inlined_call_operand.hbm [shape: f32[16,128], index: 1, kind: input, shape index: {}]
  %s2 = inlined_call_operand.hbm [shape: f32[1,1], index: 2, kind: output, shape index: {}]
  %s3 = sld [smem:[#allocation0]]
  $region34: #{tpu_custom_call.1} parent=0
    _
  %s5 = ssub.s32 1, %s3
  %s6 = scalar_select 0, %s5, %s3
  $region1: #{tpu_custom_call.1} parent=0
    #allocation3 [shape = 'u8[8192]{0}', space=vmem, size = 0x2000, scoped, tag = 'input window, operand 0, single buffered']
    #allocation4 [shape = 's32[1]{0}', space=sflag, size = 0x4, scoped, tag = 'scoped memory for tpu_custom_call.1']
    #allocation5 [shape = 's32[1]{0}', space=sflag, size = 0x4, scoped, tag = 'scoped memory for tpu_custom_call.1']
    #allocation6 [shape = 'u8[8192]{0}', space=vmem, size = 0x2000, scoped, tag = 'input window, operand 1, single buffered']
    #allocation7 [shape = 's32[1]{0}', space=sflag, size = 0x4, scoped, tag = 'scoped memory for tpu_custom_call.1']
    #allocation8 [shape = 'u8[512]{0}', space=smem, size = 0x200, scoped, tag = 'output window, operand 0, single buffered']
    %7 = vsyncpa [#allocation4], 0
    %8 = vsyncpa [#allocation7], 0
    %9 = vsyncpa [#allocation5], 0
    // Predicated region
    $region2: #{tpu_custom_call.1} parent=1 // pred_check
      _
    $region3: #{tpu_custom_call.1} parent=1 // pred_check_branch
      %11 = sbr.rel (0) target = $region5
    $region4: #{tpu_custom_call.1} parent=1 // pred_region
      %s12 = sadd.s32 0, 0
      %s13 = smul.u32 2, %s12
      %s15 = ssub.s32 256, 256
      %16 = vsyncadd [#allocation4], %s15
      %s17 = smul.addr %s13, 128
      %s18 = scalar_lea.hbm %s0, %s17
      %s19 = sshll.u32 [#allocation3], 4
      %s20 = int_to_ptr.vmem [resolvable:$true] %s19
      %25 = dma.hbm_to_vmem [thread:$0]  %s18, 256, %s20, [#allocation4], 128, 128, 8
    $region5: #{tpu_custom_call.1} parent=1 // pred_fallthru
      _
    // Predicated region
    $region6: #{tpu_custom_call.1} parent=1 // pred_check
      _
    $region7: #{tpu_custom_call.1} parent=1 // pred_check_branch
      %27 = sbr.rel (0) target = $region9
    $region8: #{tpu_custom_call.1} parent=1 // pred_region
      %s28 = sadd.s32 0, 0
      %s29 = smul.u32 2, %s28
      %s31 = ssub.s32 256, 256
      %32 = vsyncadd [#allocation7], %s31
      %s33 = smul.addr %s29, 128
      %s34 = scalar_lea.hbm %s1, %s33
      %s35 = sshll.u32 [#allocation6], 4
      %s36 = int_to_ptr.vmem [resolvable:$true] %s35
      %41 = dma.hbm_to_vmem [thread:$0]  %s34, 256, %s36, [#allocation7], 128, 128, 8
    $region9: #{tpu_custom_call.1} parent=1 // pred_fallthru
      _
    // Predicated region
    $region10: #{tpu_custom_call.1} parent=1 // pred_check
      _
    $region11: #{tpu_custom_call.1} parent=1 // pred_check_branch
      %43 = sbr.rel (0) target = $region13
    $region12: #{tpu_custom_call.1} parent=1 // pred_region
      %44 = dma.done [#allocation4], 256
    $region13: #{tpu_custom_call.1} parent=1 // pred_fallthru
      _
    // Predicated region
    $region14: #{tpu_custom_call.1} parent=1 // pred_check
      _
    $region15: #{tpu_custom_call.1} parent=1 // pred_check_branch
      %46 = sbr.rel (0) target = $region17
    $region16: #{tpu_custom_call.1} parent=1 // pred_region
      %47 = dma.done [#allocation7], 256
    $region17: #{tpu_custom_call.1} parent=1 // pred_fallthru
      _
    %s48 = sadd.s32 0, 0
    %s49 = smul.u32 2, %s48
    %s50 = sadd.s32 0, 0
    %s51 = smul.u32 2, %s50
    %p52 = scmp.eq.s32.totalorder 0, 0
    // Predicated region
    $region18: #{tpu_custom_call.1} parent=1 // pred_check
      %p53 = pneg %p52
    $region19: #{tpu_custom_call.1} parent=1 // pred_check_branch
      %55 = sbr.rel (%p53) target = $region21
    $region20: #{tpu_custom_call.1} parent=1 // pred_region
      %56 = vst [vmem:[#allocation2] sm:$0xff] 0.0
    $region21: #{tpu_custom_call.1} parent=1 // pred_fallthru
      _
    %v57 = vld [vmem:[#allocation3] sm:$0xff]
    %v58 = vld [vmem:[#allocation3 + $0x8] sm:$0xff]
    %v59 = vld [vmem:[#allocation6] sm:$0xff]
    %v60 = vld [vmem:[#allocation6 + $0x8] sm:$0xff]
    %v61 = vmul.f32 %v57, %v57
    %v62 = vmul.f32 %v58, %v58
    %v63 = vsub.f32 2.0, %v57
    %v64 = vsub.f32 2.0, %v58
    %v65 = vmax.f32 %v63, 0.0
    %v66 = vmax.f32 %v64, 0.0
    %v67 = vmul.f32 %v65, %v65
    %v68 = vmul.f32 %v66, %v66
    %v69 = vsub.f32 %v61, %v67
    %v70 = vsub.f32 %v62, %v68
    %v71 = vmul.f32 %v59, %v69
    %v72 = vmul.f32 %v60, %v70
    %v73 = vadd.f32 %v67, %v71
    %v74 = vadd.f32 %v68, %v72
    %v75 = vld [vmem:[#allocation2] sm:$0xff]
    %v76 = vadd.f32 %v73, %v74
    %v77 = vadd.f32 %v75, %v76
    %78 = vst [vmem:[#allocation2] sm:$0xff] %v77
    // Predicated region
    $region22: #{tpu_custom_call.1} parent=1 // pred_check
      %p79 = pneg %p52
    $region23: #{tpu_custom_call.1} parent=1 // pred_check_branch
      %81 = sbr.rel (%p79) target = $region25
    $region24: #{tpu_custom_call.1} parent=1 // pred_region
      %v82 = vld [vmem:[#allocation2] sm:$0xff]
      %83 = vadd.xlane.f32.xlu0 %v82
      %v84 = vpop.xlane.xlu0 %83
      %v85 = vrot.slane %v84, 4
      %v86 = vadd.f32 %v84, %v85
      %v87 = vrot.slane %v86, 2
      %v88 = vadd.f32 %v86, %v87
      %v89 = vrot.slane %v88, 1
      %v90 = vadd.f32 %v88, %v89
      %s91 = vtos %v90
      %s92 = smul.f32 %s91, 0.00024414063
      %s93 = scalar_lea.smem [#allocation8], 0
      %94 = sst [smem:[%s93]] %s92
    $region25: #{tpu_custom_call.1} parent=1 // pred_fallthru
      _
    // Predicated region
    $region26: #{tpu_custom_call.1} parent=1 // pred_check
      _
    $region27: #{tpu_custom_call.1} parent=1 // pred_check_branch
      %96 = sbr.rel (0) target = $region29
    $region28: #{tpu_custom_call.1} parent=1 // pred_region
      %s98 = ssub.s32 16, 16
      %99 = vsyncadd [#allocation5], %s98
      %102 = dma.smem_to_hbm [#allocation8], 16, %s2, [#allocation5]
    $region29: #{tpu_custom_call.1} parent=1 // pred_fallthru
      _
    // Predicated region
    $region30: #{tpu_custom_call.1} parent=1 // pred_check
      _
    $region31: #{tpu_custom_call.1} parent=1 // pred_check_branch
      %104 = sbr.rel (0) target = $region33
    $region32: #{tpu_custom_call.1} parent=1 // pred_region
      %105 = dma.done [#allocation5], 16
    $region33: #{tpu_custom_call.1} parent=1 // pred_fallthru
      _
    %106 = sfence
    %107 = vsyncpa [#allocation4], 1
    %108 = vsyncpa [#allocation7], 1
    %109 = vsyncpa [#allocation5], 1

</llo_original>
